<compile_context>
chip_gen: v5e
topology: v5e:2x2
jax: 0.10.0
libtpu: 0.0.40
codegen_flags: <defaults>
</compile_context>

<pallas_src>
import numpy as np

import jax
import jax.numpy as jnp
from jax import lax
from jax.experimental import pallas as pl
from jax.experimental.pallas import tpu as pltpu


# ----------------------------- Pallas kernel --------------------------------
# Grid: (AG,) over agents.  Per grid step the kernel sees only the current
# agent's rows / weights (BlockSpec-tiled, double-buffered by Pallas).

def _actor_head_kernel(
    x_ref,     # (N, S)  bf16  rows already in the torch-"mixed" order
    thr_ref,   # (N, 1)  f32   action mask threshold (natural output order)
    skip_ref,  # (N, 1)  f32   1.0 if this (batch, agent) row-group is skipped
    pw_ref,    # (S, H)  bf16  shared preprocess Linear (resident across grid)
    pb_ref,    # (1, H)  f32
    w1_ref,    # (H, H)  bf16  this agent's head layer 1
    b1_ref,    # (1, H)  f32
    w2_ref,    # (H, A)  bf16  this agent's head layer 2
    b2_ref,    # (1, A)  f32
    out_ref,   # (N, A)  f32   one contiguous slab per agent, already masked
):
    # shared preprocess Linear (bf16 MXU, f32 accumulation)
    h0 = jnp.dot(x_ref[...], pw_ref[...],
                 preferred_element_type=jnp.float32) + pb_ref[...]
    # per-agent head: Linear -> ReLU -> Linear
    h1 = jnp.dot(h0.astype(jnp.bfloat16), w1_ref[...],
                 preferred_element_type=jnp.float32) + b1_ref[...]
    h1 = jnp.maximum(h1, 0.0)
    y = jnp.dot(h1.astype(jnp.bfloat16), w2_ref[...],
                preferred_element_type=jnp.float32) + b2_ref[...]   # (N, A)

    # in-kernel action mask (VPU iota + compare) + explicit skip select
    act_j = lax.broadcasted_iota(jnp.int32, y.shape, 1).astype(jnp.float32)
    y = jnp.where(act_j < thr_ref[...], y, -jnp.inf)   # logits[~mask] = -inf
    y = jnp.where(skip_ref[...] > 0.5, 0.0, y)         # skipped rows -> 0

    out_ref[...] = y   # single lane-contiguous slab store per agent


# ------------------------------- forward ------------------------------------

@jax.jit
def actors_forward(params, job_types, resource, inp):
    """Returns (all_index_logits, all_allocation_logits).

    all_index_logits      : (B, agent_num, pending_num)
    all_allocation_logits : (B, agent_num, pending_num, one_discrete_action_space)
    """
    B, AG, P, S = inp.shape
    H = params["pre_w"].shape[1]
    A = params["w2"].shape[-1]
    N = B * P  # rows per agent

    # ---- tiny host prep: cheap transposes of small tensors, no big constants
    valid = job_types != -1                                         # (B, AG, P)
    skip = jnp.logical_not(jnp.any(valid, axis=-1))                 # (B, AG)
    # TODO(synk): synthetic stand-in for tools.toy_mask_one_logits
    budget = jnp.clip(jnp.sum(resource, axis=-1), 1.0, float(A))    # (B, AG)
    thr = jnp.where(valid, budget[..., None], 0.0)                  # (B, AG, P)

    # torch `permute(1,0,2).reshape(-1,H)` row "mixing", folded into the input
    # layout: x_mix[a, b_out*P + p_out] = inp[r % B, a, r // B], r = b_out*P+p_out
    x_mix = jnp.transpose(inp, (1, 2, 0, 3)).reshape(AG, N, S).astype(jnp.bfloat16)
    # mask inputs in natural output order (agent-major)
    thr_nat = jnp.transpose(thr, (1, 0, 2)).reshape(AG, N, 1).astype(jnp.float32)
    skip_nat = jnp.broadcast_to(
        skip.astype(jnp.float32).T[:, :, None], (AG, B, P)
    ).reshape(AG, N, 1)

    pw = params["pre_w"].astype(jnp.bfloat16)
    pb = params["pre_b"].astype(jnp.float32)
    w1 = params["w1"].astype(jnp.bfloat16)
    b1 = params["b1"].astype(jnp.float32)
    w2 = params["w2"].astype(jnp.bfloat16)
    b2 = params["b2"].astype(jnp.float32)

    flops = 2 * AG * N * (S * H + H * H + H * A)
    bytes_accessed = (
        x_mix.size * 2 + thr_nat.size * 4 + skip_nat.size * 4
        + pw.size * 2 + pb.size * 4 + w1.size * 2 + b1.size * 4
        + w2.size * 2 + b2.size * 4 + AG * N * A * 4
    )

    out = pl.pallas_call(
        _actor_head_kernel,
        out_shape=jax.ShapeDtypeStruct((AG, N, A), jnp.float32),
        grid=(AG,),
        in_specs=[
            pl.BlockSpec((None, N, S), lambda a: (a, 0, 0)),   # x_mix  (per agent)
            pl.BlockSpec((None, N, 1), lambda a: (a, 0, 0)),   # thr    (per agent)
            pl.BlockSpec((None, N, 1), lambda a: (a, 0, 0)),   # skip   (per agent)
            pl.BlockSpec((S, H),       lambda a: (0, 0)),      # pre_w  (resident)
            pl.BlockSpec((1, H),       lambda a: (0, 0)),      # pre_b  (resident)
            pl.BlockSpec((None, H, H), lambda a: (a, 0, 0)),   # w1     (per agent)
            pl.BlockSpec((None, 1, H), lambda a: (a, 0, 0)),   # b1     (per agent)
            pl.BlockSpec((None, H, A), lambda a: (a, 0, 0)),   # w2     (per agent)
            pl.BlockSpec((None, 1, A), lambda a: (a, 0, 0)),   # b2     (per agent)
        ],
        out_specs=pl.BlockSpec((None, N, A), lambda a: (a, 0, 0)),
        compiler_params=pltpu.CompilerParams(
            dimension_semantics=("parallel",),   # split agents across v7x TCs
        ),
        cost_estimate=pl.CostEstimate(
            flops=flops, transcendentals=0, bytes_accessed=bytes_accessed
        ),
    )(x_mix, thr_nat, skip_nat, pw, pb, w1, b1, w2, b2)

    # (AG, B*P, A) -> (B, AG, P, A): cheap reorder of the small output
    all_allocation_logits = jnp.transpose(out.reshape(AG, B, P, A), (1, 0, 2, 3))

    # ---- pointer / index logits (no_pointer semantics) ----------------------
    # TODO(synk): LSTM PointerNetwork not reproducible without its definition.
    all_index_logits = jnp.where(
        jnp.logical_or(skip[..., None], valid), 0.0, -jnp.inf
    )
    return all_index_logits, all_allocation_logits


# --------------------------- pure-JAX reference ------------------------------

def actors_forward_ref(params, job_types, resource, inp):
    """Mirrors the original torch control flow (transposes and all), in f32."""
    B, AG, P, S = inp.shape
    H = params["pre_w"].shape[1]
    A = params["w2"].shape[-1]

    x = inp.reshape(-1, S).astype(jnp.float32)
    logits = (
        jnp.dot(x, params["pre_w"], precision="highest") + params["pre_b"]
    ).reshape(B, AG, P, H)

    skip = jnp.all(job_types == -1, axis=-1)                           # (B, AG)
    budget = jnp.clip(jnp.sum(resource, axis=-1), 1.0, float(A))       # (B, AG)
    act_ids = jnp.arange(A, dtype=jnp.float32)
    mask = (job_types[..., None] != -1) & (
        act_ids[None, None, None, :] < budget[..., None, None]
    )                                                                  # (B, AG, P, A)

    allocs = []
    for a in range(AG):
        xa = jnp.transpose(logits[:, a], (1, 0, 2)).reshape(-1, H)     # p-major rows
        h = jnp.maximum(
            jnp.dot(xa, params["w1"][a], precision="highest") + params["b1"][a], 0.0
        )
        y = jnp.dot(h, params["w2"][a], precision="highest") + params["b2"][a]
        y = y.reshape(B, P, A)                                         # torch "mixing"
        y = jnp.where(mask[:, a], y, -jnp.inf)
        allocs.append(y)
    alloc = jnp.stack(allocs, axis=1)                                  # (B, AG, P, A)

    all_idx = jnp.where(
        skip[..., None], 0.0, jnp.where(job_types == -1, -jnp.inf, 0.0)
    )
    all_alloc = jnp.where(skip[..., None, None], 0.0, alloc)
    return all_idx, all_alloc


# ------------------------------ param init ----------------------------------

def init_params(key, n_agents, stacking_dim, hidden_dim, action_dim):
    ks = jax.random.split(key, 6)
    scale = 0.1
    return {
        # shared preprocess net: Linear(stacking_dim, hidden_dim)
        "pre_w": scale * jax.random.normal(ks[0], (stacking_dim, hidden_dim), jnp.float32),
        "pre_b": scale * jax.random.normal(ks[1], (1, hidden_dim), jnp.float32),
        # per-agent `last` head: Linear(H,H) -> ReLU -> Linear(H, A)
        "w1": scale * jax.random.normal(ks[2], (n_agents, hidden_dim, hidden_dim), jnp.float32),
        "b1": scale * jax.random.normal(ks[3], (n_agents, 1, hidden_dim), jnp.float32),
        "w2": scale * jax.random.normal(ks[4], (n_agents, hidden_dim, action_dim), jnp.float32),
        "b2": scale * jax.random.normal(ks[5], (n_agents, 1, action_dim), jnp.float32),
    }


# --------------------------------- main --------------------------------------

if __name__ == "__main__":
    # config values (synthetic, small)
    B = 4                # batch size
    AGENT_NUM = 2        # config.agent_num
    PENDING = 4          # config.pending_num
    STACK = 8            # config.stacking_dim
    HIDDEN = 32          # config.hidden_dim
    ACT = 16             # config.one_discrete_action_space

    key = jax.random.PRNGKey(0)
    k_inp, k_job, k_res, k_par = jax.random.split(key, 4)

    inp = jax.random.normal(k_inp, (B, AGENT_NUM, PENDING, STACK), jnp.float32)
    job_types = jax.random.randint(k_job, (B, AGENT_NUM, PENDING), -1, 3).astype(jnp.int32)
    # force one (batch, agent) slot to be fully padded to exercise skip_mask
    job_types = job_types.at[0, 0].set(-1)
    resource = 5.0 * jax.random.uniform(k_res, (B, AGENT_NUM, 3), dtype=jnp.float32)

    params = init_params(k_par, AGENT_NUM, STACK, HIDDEN, ACT)

    all_index_logits, all_allocation_logits = actors_forward(
        params, job_types, resource, inp
    )
    jax.block_until_ready((all_index_logits, all_allocation_logits))

    assert all_index_logits.shape == (B, AGENT_NUM, PENDING)
    assert all_allocation_logits.shape == (B, AGENT_NUM, PENDING, ACT)

    # correctness check against a pure-JAX f32 mirror of the torch control flow
    # (tolerances account for bf16 matmul operands with f32 accumulation)
    ref_idx, ref_alloc = actors_forward_ref(params, job_types, resource, inp)
    np.testing.assert_allclose(
        np.asarray(all_index_logits), np.asarray(ref_idx), rtol=2e-2, atol=2e-2
    )
    np.testing.assert_allclose(
        np.asarray(all_allocation_logits), np.asarray(ref_alloc), rtol=2e-2, atol=2e-2
    )
    print("KERNEL_OK")
</pallas_src>

<mosaic_0001>
module attributes {stable_mosaic.version = 11 : i64} {
  func.func @_actor_head_kernel(%arg0: i32, %arg1: memref<1x16x8xbf16, #tpu.memory_space<vmem>>, %arg2: memref<1x16x1xf32, #tpu.memory_space<vmem>>, %arg3: memref<1x16x1xf32, #tpu.memory_space<vmem>>, %arg4: memref<8x32xbf16, #tpu.memory_space<vmem>>, %arg5: memref<1x32xf32, #tpu.memory_space<vmem>>, %arg6: memref<1x32x32xbf16, #tpu.memory_space<vmem>>, %arg7: memref<1x1x32xf32, #tpu.memory_space<vmem>>, %arg8: memref<1x32x16xbf16, #tpu.memory_space<vmem>>, %arg9: memref<1x1x16xf32, #tpu.memory_space<vmem>>, %arg10: memref<1x16x16xf32, #tpu.memory_space<vmem>>) attributes {dimension_semantics = [#tpu.dimension_semantics<parallel>], iteration_bounds = array<i64: 2>, scalar_prefetch = 0 : i64, scratch_operands = 0 : i64, tpu.core_type = #tpu.core_type<tc>, window_params = [{transform_indices = @transform_0, window_bounds = array<i64: 1, 16, 8>}, {transform_indices = @transform_1, window_bounds = array<i64: 1, 16, 1>}, {transform_indices = @transform_2, window_bounds = array<i64: 1, 16, 1>}, {pipeline_mode = #tpu.pipeline_mode<synchronous>, transform_indices = @transform_3, window_bounds = array<i64: 8, 32>}, {pipeline_mode = #tpu.pipeline_mode<synchronous>, transform_indices = @transform_4, window_bounds = array<i64: 1, 32>}, {transform_indices = @transform_5, window_bounds = array<i64: 1, 32, 32>}, {transform_indices = @transform_6, window_bounds = array<i64: 1, 1, 32>}, {transform_indices = @transform_7, window_bounds = array<i64: 1, 32, 16>}, {transform_indices = @transform_8, window_bounds = array<i64: 1, 1, 16>}, {transform_indices = @transform_9, window_bounds = array<i64: 1, 16, 16>}]} {
    %c0 = arith.constant 0 : index
    %c0_0 = arith.constant 0 : index
    %c0_1 = arith.constant 0 : index
    %0 = vector.load %arg1[%c0, %c0_0, %c0_1] : memref<1x16x8xbf16, #tpu.memory_space<vmem>>, vector<1x16x8xbf16>
    %1 = vector.shape_cast %0 : vector<1x16x8xbf16> to vector<16x8xbf16>
    %c0_2 = arith.constant 0 : index
    %c0_3 = arith.constant 0 : index
    %2 = vector.load %arg4[%c0_2, %c0_3] : memref<8x32xbf16, #tpu.memory_space<vmem>>, vector<8x32xbf16>
    %cst = arith.constant dense<0.000000e+00> : vector<16x32xf32>
    %3 = tpu.matmul %1, %2, %cst {dimension_numbers = #tpu.dot_dimension_numbers<[1], [0], [0], [1], [0, 0, 1, 1], [], []>} : vector<16x8xbf16>, vector<8x32xbf16>, vector<16x32xf32> -> vector<16x32xf32>
    %c0_4 = arith.constant 0 : index
    %c0_5 = arith.constant 0 : index
    %4 = vector.load %arg5[%c0_4, %c0_5] : memref<1x32xf32, #tpu.memory_space<vmem>>, vector<1x32xf32>
    %5 = vector.broadcast %4 : vector<1x32xf32> to vector<16x32xf32>
    %6 = arith.addf %3, %5 : vector<16x32xf32>
    %7 = arith.truncf %6 : vector<16x32xf32> to vector<16x32xbf16>
    %c0_6 = arith.constant 0 : index
    %c0_7 = arith.constant 0 : index
    %c0_8 = arith.constant 0 : index
    %8 = vector.load %arg6[%c0_6, %c0_7, %c0_8] : memref<1x32x32xbf16, #tpu.memory_space<vmem>>, vector<1x32x32xbf16>
    %9 = vector.shape_cast %8 : vector<1x32x32xbf16> to vector<32x32xbf16>
    %cst_9 = arith.constant dense<0.000000e+00> : vector<16x32xf32>
    %10 = tpu.matmul %7, %9, %cst_9 {dimension_numbers = #tpu.dot_dimension_numbers<[1], [0], [0], [1], [0, 0, 1, 1], [], []>} : vector<16x32xbf16>, vector<32x32xbf16>, vector<16x32xf32> -> vector<16x32xf32>
    %c0_10 = arith.constant 0 : index
    %c0_11 = arith.constant 0 : index
    %c0_12 = arith.constant 0 : index
    %11 = vector.load %arg7[%c0_10, %c0_11, %c0_12] : memref<1x1x32xf32, #tpu.memory_space<vmem>>, vector<1x1x32xf32>
    %12 = vector.shape_cast %11 : vector<1x1x32xf32> to vector<1x32xf32>
    %13 = vector.broadcast %12 : vector<1x32xf32> to vector<16x32xf32>
    %14 = arith.addf %10, %13 : vector<16x32xf32>
    %cst_13 = arith.constant 0.000000e+00 : f32
    %15 = vector.broadcast %cst_13 : f32 to vector<16x32xf32>
    %16 = arith.maximumf %14, %15 : vector<16x32xf32>
    %17 = arith.truncf %16 : vector<16x32xf32> to vector<16x32xbf16>
    %c0_14 = arith.constant 0 : index
    %c0_15 = arith.constant 0 : index
    %c0_16 = arith.constant 0 : index
    %18 = vector.load %arg8[%c0_14, %c0_15, %c0_16] : memref<1x32x16xbf16, #tpu.memory_space<vmem>>, vector<1x32x16xbf16>
    %19 = vector.shape_cast %18 : vector<1x32x16xbf16> to vector<32x16xbf16>
    %cst_17 = arith.constant dense<0.000000e+00> : vector<16x16xf32>
    %20 = tpu.matmul %17, %19, %cst_17 {dimension_numbers = #tpu.dot_dimension_numbers<[1], [0], [0], [1], [0, 0, 1, 1], [], []>} : vector<16x32xbf16>, vector<32x16xbf16>, vector<16x16xf32> -> vector<16x16xf32>
    %c0_18 = arith.constant 0 : index
    %c0_19 = arith.constant 0 : index
    %c0_20 = arith.constant 0 : index
    %21 = vector.load %arg9[%c0_18, %c0_19, %c0_20] : memref<1x1x16xf32, #tpu.memory_space<vmem>>, vector<1x1x16xf32>
    %22 = vector.shape_cast %21 : vector<1x1x16xf32> to vector<1x16xf32>
    %23 = vector.broadcast %22 : vector<1x16xf32> to vector<16x16xf32>
    %24 = arith.addf %20, %23 : vector<16x16xf32>
    %25 = tpu.iota {dimensions = array<i32: 1>} : vector<16x16xi32>
    %26 = arith.sitofp %25 : vector<16x16xi32> to vector<16x16xf32>
    %c0_21 = arith.constant 0 : index
    %c0_22 = arith.constant 0 : index
    %c0_23 = arith.constant 0 : index
    %27 = vector.load %arg2[%c0_21, %c0_22, %c0_23] : memref<1x16x1xf32, #tpu.memory_space<vmem>>, vector<1x16x1xf32>
    %28 = vector.shape_cast %27 : vector<1x16x1xf32> to vector<16x1xf32>
    %29 = vector.broadcast %28 : vector<16x1xf32> to vector<16x16xf32>
    %30 = arith.cmpf olt, %26, %29 : vector<16x16xf32>
    %cst_24 = arith.constant 0xFF800000 : f32
    %31 = vector.broadcast %cst_24 : f32 to vector<16x16xf32>
    %32 = arith.select %30, %24, %31 : vector<16x16xi1>, vector<16x16xf32>
    %c0_25 = arith.constant 0 : index
    %c0_26 = arith.constant 0 : index
    %c0_27 = arith.constant 0 : index
    %33 = vector.load %arg3[%c0_25, %c0_26, %c0_27] : memref<1x16x1xf32, #tpu.memory_space<vmem>>, vector<1x16x1xf32>
    %34 = vector.shape_cast %33 : vector<1x16x1xf32> to vector<16x1xf32>
    %cst_28 = arith.constant 5.000000e-01 : f32
    %35 = vector.broadcast %cst_28 : f32 to vector<16x1xf32>
    %36 = arith.cmpf ogt, %34, %35 : vector<16x1xf32>
    %cst_29 = arith.constant 0.000000e+00 : f32
    %37 = vector.shape_cast %36 : vector<16x1xi1> to vector<16x1xi1>
    %38 = vector.broadcast %37 : vector<16x1xi1> to vector<16x16xi1>
    %39 = vector.broadcast %cst_29 : f32 to vector<16x16xf32>
    %40 = arith.select %38, %39, %32 : vector<16x16xi1>, vector<16x16xf32>
    %c0_30 = arith.constant 0 : index
    %c0_31 = arith.constant 0 : index
    %c0_32 = arith.constant 0 : index
    %41 = vector.load %arg10[%c0_30, %c0_31, %c0_32] : memref<1x16x16xf32, #tpu.memory_space<vmem>>, vector<1x16x16xf32>
    %42 = vector.shape_cast %41 : vector<1x16x16xf32> to vector<16x16xf32>
    %43 = vector.shape_cast %40 : vector<16x16xf32> to vector<1x16x16xf32>
    tpu.vector_store %arg10[%c0_30, %c0_31, %c0_32], %43 {strides = array<i32>} : memref<1x16x16xf32, #tpu.memory_space<vmem>>, vector<1x16x16xf32>,
    return
  }
  func.func @transform_0(%arg0: i32) -> (i32, i32, i32) {
    %c0_i32 = arith.constant 0 : i32
    %c0_i32_0 = arith.constant 0 : i32
    %c0_i32_1 = arith.constant 0 : i32
    return %arg0, %c0_i32, %c0_i32_0 : i32, i32, i32
  }
  func.func @transform_1(%arg0: i32) -> (i32, i32, i32) {
    %c0_i32 = arith.constant 0 : i32
    %c0_i32_0 = arith.constant 0 : i32
    %c0_i32_1 = arith.constant 0 : i32
    return %arg0, %c0_i32, %c0_i32_0 : i32, i32, i32
  }
  func.func @transform_2(%arg0: i32) -> (i32, i32, i32) {
    %c0_i32 = arith.constant 0 : i32
    %c0_i32_0 = arith.constant 0 : i32
    %c0_i32_1 = arith.constant 0 : i32
    return %arg0, %c0_i32, %c0_i32_0 : i32, i32, i32
  }
  func.func @transform_3(%arg0: i32) -> (i32, i32) {
    %c0_i32 = arith.constant 0 : i32
    %c0_i32_0 = arith.constant 0 : i32
    %c0_i32_1 = arith.constant 0 : i32
    return %c0_i32, %c0_i32_0 : i32, i32
  }
  func.func @transform_4(%arg0: i32) -> (i32, i32) {
    %c0_i32 = arith.constant 0 : i32
    %c0_i32_0 = arith.constant 0 : i32
    %c0_i32_1 = arith.constant 0 : i32
    return %c0_i32, %c0_i32_0 : i32, i32
  }
  func.func @transform_5(%arg0: i32) -> (i32, i32, i32) {
    %c0_i32 = arith.constant 0 : i32
    %c0_i32_0 = arith.constant 0 : i32
    %c0_i32_1 = arith.constant 0 : i32
    return %arg0, %c0_i32, %c0_i32_0 : i32, i32, i32
  }
  func.func @transform_6(%arg0: i32) -> (i32, i32, i32) {
    %c0_i32 = arith.constant 0 : i32
    %c0_i32_0 = arith.constant 0 : i32
    %c0_i32_1 = arith.constant 0 : i32
    return %arg0, %c0_i32, %c0_i32_0 : i32, i32, i32
  }
  func.func @transform_7(%arg0: i32) -> (i32, i32, i32) {
    %c0_i32 = arith.constant 0 : i32
    %c0_i32_0 = arith.constant 0 : i32
    %c0_i32_1 = arith.constant 0 : i32
    return %arg0, %c0_i32, %c0_i32_0 : i32, i32, i32
  }
  func.func @transform_8(%arg0: i32) -> (i32, i32, i32) {
    %c0_i32 = arith.constant 0 : i32
    %c0_i32_0 = arith.constant 0 : i32
    %c0_i32_1 = arith.constant 0 : i32
    return %arg0, %c0_i32, %c0_i32_0 : i32, i32, i32
  }
  func.func @transform_9(%arg0: i32) -> (i32, i32, i32) {
    %c0_i32 = arith.constant 0 : i32
    %c0_i32_0 = arith.constant 0 : i32
    %c0_i32_1 = arith.constant 0 : i32
    return %arg0, %c0_i32, %c0_i32_0 : i32, i32, i32
  }
}

</mosaic_0001>

<llo_original>
// kernel: actors_forward.1
$region0: #{actors_forward.1}
  #allocation0 [shape = 'u32[]', space=smem, size = 0x4, offset = 0x4, fixed_abs, tag = 'smem constant byte address 0x4 - core index']
  #allocation1 [shape = 'u32[72,128]{1,0:T(1,128)}', space=vmem, size = 0x9000, scoped, tag = 'internal scratch']
  %s0 = inlined_call_operand.vmem [shape: bf16[2,16,8], index: 0, kind: input, shape index: {}]
  %s1 = inlined_call_operand.vmem [shape: f32[2,16,1], index: 1, kind: input, shape index: {}]
  %s2 = inlined_call_operand.vmem [shape: f32[2,16,1], index: 2, kind: input, shape index: {}]
  %s3 = inlined_call_operand.vmem [shape: bf16[8,32], index: 3, kind: input, shape index: {}]
  %s4 = inlined_call_operand.vmem [shape: f32[1,32], index: 4, kind: input, shape index: {}]
  %s5 = inlined_call_operand.vmem [shape: bf16[2,32,32], index: 5, kind: input, shape index: {}]
  %s6 = inlined_call_operand.vmem [shape: f32[2,1,32], index: 6, kind: input, shape index: {}]
  %s7 = inlined_call_operand.vmem [shape: bf16[2,32,16], index: 7, kind: input, shape index: {}]
  %s8 = inlined_call_operand.vmem [shape: f32[2,1,16], index: 8, kind: input, shape index: {}]
  %s9 = inlined_call_operand.vmem [shape: f32[2,16,16], index: 9, kind: output, shape index: {}]
  %s10 = sld [smem:[#allocation0]]
  $region69: #{actors_forward.1} parent=0
    _
  %s12 = ssub.s32 1, %s10
  %s13 = scalar_select 0, %s12, %s10
  loop: start=0, step=1, limit=4
  $region2: #{actors_forward.1} parent=0 // loop_pre_header
    _
  $region3: #{actors_forward.1} parent=0 // loop_header
    %s15 = sphi 0, %s19
    %p16 = scmp.ge.s32.totalorder %s15, 4
    %s25 = sphi 0, %s27
    %s28 = sphi 0, %s25
    %s29 = sphi 0, %s28
    %s45 = sphi 0, %s29
    %s51 = sphi 0, %s53
    %s54 = sphi 0, %s51
    %s55 = sphi 0, %s54
    %s71 = sphi 0, %s55
    %s77 = sphi 0, %s79
    %s80 = sphi 0, %s77
    %s81 = sphi 0, %s80
    %s97 = sphi 0, %s81
    %s101 = sphi 0, %s101
    %s103 = sphi 0, %s101
    %s104 = sphi 0, %s103
    %s118 = sphi 0, %s104
    %s122 = sphi 0, %s122
    %s124 = sphi 0, %s122
    %s125 = sphi 0, %s124
    %s139 = sphi 0, %s125
    %s145 = sphi 0, %s147
    %s148 = sphi 0, %s145
    %s149 = sphi 0, %s148
    %s165 = sphi 0, %s149
    %s171 = sphi 0, %s173
    %s174 = sphi 0, %s171
    %s175 = sphi 0, %s174
    %s191 = sphi 0, %s175
    %s197 = sphi 0, %s199
    %s200 = sphi 0, %s197
    %s201 = sphi 0, %s200
    %s217 = sphi 0, %s201
    %s223 = sphi 0, %s225
    %s226 = sphi 0, %s223
    %s227 = sphi 0, %s226
    %s243 = sphi 0, %s227
    %s249 = sphi 0, %s251
    %s252 = sphi 0, %s249
    %s253 = sphi 0, %s252
    %s269 = sphi 0, %s253
  $region4: #{actors_forward.1} parent=0 // loop_header_branch
    %18 = sbr.rel (%p16) target = $region8
  $region5: #{actors_forward.1} parent=0 // loop_body
    %s20 = ssub.s32 %s15, 1
    %s21 = ssub.s32 %s15, 2
    %s22 = sadd.s32 %s15, 1
    %s23 = ssub.s32 %s15, %s22
    %p24 = scmp.eq.s32.totalorder %s23, 0
    %s26 = sadd.s32 %s25, 1
    %s27 = scalar_select %p24, %s25, %s26
    %p30 = pneg %p24
    %p31 = scmp.eq.s32.totalorder %s15, 1
    %p32 = por %p30, %p31
    %p33 = scmp.ne.s32.totalorder %s25, %s28
    %p34 = scmp.eq.s32.totalorder %s15, 0
    %p35 = por %p33, %p34
    %p36 = scmp.ne.s32.totalorder %s25, %s28
    %p37 = scmp.eq.s32.totalorder %s20, 1
    %p38 = por %p36, %p37
    %p39 = scmp.ne.s32.totalorder %s28, %s29
    %p40 = scmp.eq.s32.totalorder %s20, 0
    %p41 = por %p39, %p40
    %p42 = scmp.ne.s32.totalorder %s28, %s29
    %p43 = scmp.eq.s32.totalorder %s21, 1
    %p44 = por %p42, %p43
    %p46 = scmp.ne.s32.totalorder %s29, %s45
    %p47 = scmp.eq.s32.totalorder %s21, 0
    %p48 = por %p46, %p47
    %s49 = ssub.s32 %s15, %s22
    %p50 = scmp.eq.s32.totalorder %s49, 0
    %s52 = sadd.s32 %s51, 1
    %s53 = scalar_select %p50, %s51, %s52
    %p56 = pneg %p50
    %p57 = scmp.eq.s32.totalorder %s15, 1
    %p58 = por %p56, %p57
    %p59 = scmp.ne.s32.totalorder %s51, %s54
    %p60 = scmp.eq.s32.totalorder %s15, 0
    %p61 = por %p59, %p60
    %p62 = scmp.ne.s32.totalorder %s51, %s54
    %p63 = scmp.eq.s32.totalorder %s20, 1
    %p64 = por %p62, %p63
    %p65 = scmp.ne.s32.totalorder %s54, %s55
    %p66 = scmp.eq.s32.totalorder %s20, 0
    %p67 = por %p65, %p66
    %p68 = scmp.ne.s32.totalorder %s54, %s55
    %p69 = scmp.eq.s32.totalorder %s21, 1
    %p70 = por %p68, %p69
    %p72 = scmp.ne.s32.totalorder %s55, %s71
    %p73 = scmp.eq.s32.totalorder %s21, 0
    %p74 = por %p72, %p73
    %s75 = ssub.s32 %s15, %s22
    %p76 = scmp.eq.s32.totalorder %s75, 0
    %s78 = sadd.s32 %s77, 1
    %s79 = scalar_select %p76, %s77, %s78
    %p82 = pneg %p76
    %p83 = scmp.eq.s32.totalorder %s15, 1
    %p84 = por %p82, %p83
    %p85 = scmp.ne.s32.totalorder %s77, %s80
    %p86 = scmp.eq.s32.totalorder %s15, 0
    %p87 = por %p85, %p86
    %p88 = scmp.ne.s32.totalorder %s77, %s80
    %p89 = scmp.eq.s32.totalorder %s20, 1
    %p90 = por %p88, %p89
    %p91 = scmp.ne.s32.totalorder %s80, %s81
    %p92 = scmp.eq.s32.totalorder %s20, 0
    %p93 = por %p91, %p92
    %p94 = scmp.ne.s32.totalorder %s80, %s81
    %p95 = scmp.eq.s32.totalorder %s21, 1
    %p96 = por %p94, %p95
    %p98 = scmp.ne.s32.totalorder %s81, %s97
    %p99 = scmp.eq.s32.totalorder %s21, 0
    %p100 = por %p98, %p99
    %s102 = sadd.s32 %s101, 1
    %p105 = scmp.eq.s32.totalorder %s15, 1
    %p106 = scmp.ne.s32.totalorder %s101, %s103
    %p107 = scmp.eq.s32.totalorder %s15, 0
    %p108 = por %p106, %p107
    %p109 = scmp.ne.s32.totalorder %s101, %s103
    %p110 = scmp.eq.s32.totalorder %s20, 1
    %p111 = por %p109, %p110
    %p112 = scmp.ne.s32.totalorder %s103, %s104
    %p113 = scmp.eq.s32.totalorder %s20, 0
    %p114 = por %p112, %p113
    %p115 = scmp.ne.s32.totalorder %s103, %s104
    %p116 = scmp.eq.s32.totalorder %s21, 1
    %p117 = por %p115, %p116
    %p119 = scmp.ne.s32.totalorder %s104, %s118
    %p120 = scmp.eq.s32.totalorder %s21, 0
    %p121 = por %p119, %p120
    %s123 = sadd.s32 %s122, 1
    %p126 = scmp.eq.s32.totalorder %s15, 1
    %p127 = scmp.ne.s32.totalorder %s122, %s124
    %p128 = scmp.eq.s32.totalorder %s15, 0
    %p129 = por %p127, %p128
    %p130 = scmp.ne.s32.totalorder %s122, %s124
    %p131 = scmp.eq.s32.totalorder %s20, 1
    %p132 = por %p130, %p131
    %p133 = scmp.ne.s32.totalorder %s124, %s125
    %p134 = scmp.eq.s32.totalorder %s20, 0
    %p135 = por %p133, %p134
    %p136 = scmp.ne.s32.totalorder %s124, %s125
    %p137 = scmp.eq.s32.totalorder %s21, 1
    %p138 = por %p136, %p137
    %p140 = scmp.ne.s32.totalorder %s125, %s139
    %p141 = scmp.eq.s32.totalorder %s21, 0
    %p142 = por %p140, %p141
    %s143 = ssub.s32 %s15, %s22
    %p144 = scmp.eq.s32.totalorder %s143, 0
    %s146 = sadd.s32 %s145, 1
    %s147 = scalar_select %p144, %s145, %s146
    %p150 = pneg %p144
    %p151 = scmp.eq.s32.totalorder %s15, 1
    %p152 = por %p150, %p151
    %p153 = scmp.ne.s32.totalorder %s145, %s148
    %p154 = scmp.eq.s32.totalorder %s15, 0
    %p155 = por %p153, %p154
    %p156 = scmp.ne.s32.totalorder %s145, %s148
    %p157 = scmp.eq.s32.totalorder %s20, 1
    %p158 = por %p156, %p157
    %p159 = scmp.ne.s32.totalorder %s148, %s149
    %p160 = scmp.eq.s32.totalorder %s20, 0
    %p161 = por %p159, %p160
    %p162 = scmp.ne.s32.totalorder %s148, %s149
    %p163 = scmp.eq.s32.totalorder %s21, 1
    %p164 = por %p162, %p163
    %p166 = scmp.ne.s32.totalorder %s149, %s165
    %p167 = scmp.eq.s32.totalorder %s21, 0
    %p168 = por %p166, %p167
    %s169 = ssub.s32 %s15, %s22
    %p170 = scmp.eq.s32.totalorder %s169, 0
    %s172 = sadd.s32 %s171, 1
    %s173 = scalar_select %p170, %s171, %s172
    %p176 = pneg %p170
    %p177 = scmp.eq.s32.totalorder %s15, 1
    %p178 = por %p176, %p177
    %p179 = scmp.ne.s32.totalorder %s171, %s174
    %p180 = scmp.eq.s32.totalorder %s15, 0
    %p181 = por %p179, %p180
    %p182 = scmp.ne.s32.totalorder %s171, %s174
    %p183 = scmp.eq.s32.totalorder %s20, 1
    %p184 = por %p182, %p183
    %p185 = scmp.ne.s32.totalorder %s174, %s175
    %p186 = scmp.eq.s32.totalorder %s20, 0
    %p187 = por %p185, %p186
    %p188 = scmp.ne.s32.totalorder %s174, %s175
    %p189 = scmp.eq.s32.totalorder %s21, 1
    %p190 = por %p188, %p189
    %p192 = scmp.ne.s32.totalorder %s175, %s191
    %p193 = scmp.eq.s32.totalorder %s21, 0
    %p194 = por %p192, %p193
    %s195 = ssub.s32 %s15, %s22
    %p196 = scmp.eq.s32.totalorder %s195, 0
    %s198 = sadd.s32 %s197, 1
    %s199 = scalar_select %p196, %s197, %s198
    %p202 = pneg %p196
    %p203 = scmp.eq.s32.totalorder %s15, 1
    %p204 = por %p202, %p203
    %p205 = scmp.ne.s32.totalorder %s197, %s200
    %p206 = scmp.eq.s32.totalorder %s15, 0
    %p207 = por %p205, %p206
    %p208 = scmp.ne.s32.totalorder %s197, %s200
    %p209 = scmp.eq.s32.totalorder %s20, 1
    %p210 = por %p208, %p209
    %p211 = scmp.ne.s32.totalorder %s200, %s201
    %p212 = scmp.eq.s32.totalorder %s20, 0
    %p213 = por %p211, %p212
    %p214 = scmp.ne.s32.totalorder %s200, %s201
    %p215 = scmp.eq.s32.totalorder %s21, 1
    %p216 = por %p214, %p215
    %p218 = scmp.ne.s32.totalorder %s201, %s217
    %p219 = scmp.eq.s32.totalorder %s21, 0
    %p220 = por %p218, %p219
    %s221 = ssub.s32 %s15, %s22
    %p222 = scmp.eq.s32.totalorder %s221, 0
    %s224 = sadd.s32 %s223, 1
    %s225 = scalar_select %p222, %s223, %s224
    %p228 = pneg %p222
    %p229 = scmp.eq.s32.totalorder %s15, 1
    %p230 = por %p228, %p229
    %p231 = scmp.ne.s32.totalorder %s223, %s226
    %p232 = scmp.eq.s32.totalorder %s15, 0
    %p233 = por %p231, %p232
    %p234 = scmp.ne.s32.totalorder %s223, %s226
    %p235 = scmp.eq.s32.totalorder %s20, 1
    %p236 = por %p234, %p235
    %p237 = scmp.ne.s32.totalorder %s226, %s227
    %p238 = scmp.eq.s32.totalorder %s20, 0
    %p239 = por %p237, %p238
    %p240 = scmp.ne.s32.totalorder %s226, %s227
    %p241 = scmp.eq.s32.totalorder %s21, 1
    %p242 = por %p240, %p241
    %p244 = scmp.ne.s32.totalorder %s227, %s243
    %p245 = scmp.eq.s32.totalorder %s21, 0
    %p246 = por %p244, %p245
    %s247 = ssub.s32 %s15, %s22
    %p248 = scmp.eq.s32.totalorder %s247, 0
    %s250 = sadd.s32 %s249, 1
    %s251 = scalar_select %p248, %s249, %s250
    %p254 = pneg %p248
    %p255 = scmp.eq.s32.totalorder %s15, 1
    %p256 = por %p254, %p255
    %p257 = scmp.ne.s32.totalorder %s249, %s252
    %p258 = scmp.eq.s32.totalorder %s15, 0
    %p259 = por %p257, %p258
    %p260 = scmp.ne.s32.totalorder %s249, %s252
    %p261 = scmp.eq.s32.totalorder %s20, 1
    %p262 = por %p260, %p261
    %p263 = scmp.ne.s32.totalorder %s252, %s253
    %p264 = scmp.eq.s32.totalorder %s20, 0
    %p265 = por %p263, %p264
    %p266 = scmp.ne.s32.totalorder %s252, %s253
    %p267 = scmp.eq.s32.totalorder %s21, 1
    %p268 = por %p266, %p267
    %p270 = scmp.ne.s32.totalorder %s253, %s269
    %p271 = scmp.eq.s32.totalorder %s21, 0
    %p272 = por %p270, %p271
    %p273 = scmp.le.s32.totalorder 1, %s15
    %p274 = scmp.lt.s32.totalorder %s15, 3
    %p275 = pnand %p273, %p274
    %p276 = pneg %p275
    // Predicated region
    $region9: #{actors_forward.1} parent=5 // pred_check
      _
    $region10: #{actors_forward.1} parent=5 // pred_check_branch
      %278 = sbr.rel (%p275) target = $region12
    $region11: #{actors_forward.1} parent=5 // pred_region
      %s279 = ssub.s32 %s15, 1
      // Predicated region
      $region13: #{actors_forward.1} parent=11 // pred_check
        %p280 = pneg %p114
      $region14: #{actors_forward.1} parent=11 // pred_check_branch
        %282 = sbr.rel (%p280) target = $region16
      $region15: #{actors_forward.1} parent=11 // pred_region
        _
      $region16: #{actors_forward.1} parent=11 // pred_fallthru
        _
      // Predicated region
      $region17: #{actors_forward.1} parent=11 // pred_check
        %p283 = pneg %p135
      $region18: #{actors_forward.1} parent=11 // pred_check_branch
        %285 = sbr.rel (%p283) target = $region20
      $region19: #{actors_forward.1} parent=11 // pred_region
        _
      $region20: #{actors_forward.1} parent=11 // pred_fallthru
        _
    $region12: #{actors_forward.1} parent=5 // pred_fallthru
      _
    %p286 = scmp.lt.s32.totalorder %s15, 2
    // Predicated region
    $region21: #{actors_forward.1} parent=5 // pred_check
      %p287 = pneg %p286
    $region22: #{actors_forward.1} parent=5 // pred_check_branch
      %289 = sbr.rel (%p287) target = $region24
    $region23: #{actors_forward.1} parent=5 // pred_region
      // Predicated region
      $region25: #{actors_forward.1} parent=23 // pred_check
        %p290 = pneg %p35
      $region26: #{actors_forward.1} parent=23 // pred_check_branch
        %292 = sbr.rel (%p290) target = $region28
      $region27: #{actors_forward.1} parent=23 // pred_region
        %p293 = scmp.lt.s32.totalorder %s15, 1
        %s294 = scalar_select %p293, %s15, 1
        %s295 = smul.addr %s294, 2
        %s296 = smul.addr %s295, 4
        %s297 = scalar_lea.vmem %s0, %s296
      $region28: #{actors_forward.1} parent=23 // pred_fallthru
        _
      // Predicated region
      $region29: #{actors_forward.1} parent=23 // pred_check
        %p298 = pneg %p61
      $region30: #{actors_forward.1} parent=23 // pred_check_branch
        %300 = sbr.rel (%p298) target = $region32
      $region31: #{actors_forward.1} parent=23 // pred_region
        %p301 = scmp.lt.s32.totalorder %s15, 1
        %s302 = scalar_select %p301, %s15, 1
        %s303 = smul.addr %s302, 2
        %s304 = smul.addr %s303, 8
        %s305 = scalar_lea.vmem %s1, %s304
      $region32: #{actors_forward.1} parent=23 // pred_fallthru
        _
      // Predicated region
      $region33: #{actors_forward.1} parent=23 // pred_check
        %p306 = pneg %p87
      $region34: #{actors_forward.1} parent=23 // pred_check_branch
        %308 = sbr.rel (%p306) target = $region36
      $region35: #{actors_forward.1} parent=23 // pred_region
        %p309 = scmp.lt.s32.totalorder %s15, 1
        %s310 = scalar_select %p309, %s15, 1
        %s311 = smul.addr %s310, 2
        %s312 = smul.addr %s311, 8
        %s313 = scalar_lea.vmem %s2, %s312
      $region36: #{actors_forward.1} parent=23 // pred_fallthru
        _
      // Predicated region
      $region37: #{actors_forward.1} parent=23 // pred_check
        %p314 = pneg %p155
      $region38: #{actors_forward.1} parent=23 // pred_check_branch
        %316 = sbr.rel (%p314) target = $region40
      $region39: #{actors_forward.1} parent=23 // pred_region
        %p317 = scmp.lt.s32.totalorder %s15, 1
        %s318 = scalar_select %p317, %s15, 1
        %s319 = smul.addr %s318, 4
        %s320 = smul.addr %s319, 4
        %s321 = scalar_lea.vmem %s5, %s320
      $region40: #{actors_forward.1} parent=23 // pred_fallthru
        _
      // Predicated region
      $region41: #{actors_forward.1} parent=23 // pred_check
        %p322 = pneg %p181
      $region42: #{actors_forward.1} parent=23 // pred_check_branch
        %324 = sbr.rel (%p322) target = $region44
      $region43: #{actors_forward.1} parent=23 // pred_region
        %p325 = scmp.lt.s32.totalorder %s15, 1
        %s326 = scalar_select %p325, %s15, 1
        %s327 = scalar_lea.vmem %s6, %s326
      $region44: #{actors_forward.1} parent=23 // pred_fallthru
        _
      // Predicated region
      $region45: #{actors_forward.1} parent=23 // pred_check
        %p328 = pneg %p207
      $region46: #{actors_forward.1} parent=23 // pred_check_branch
        %330 = sbr.rel (%p328) target = $region48
      $region47: #{actors_forward.1} parent=23 // pred_region
        %p331 = scmp.lt.s32.totalorder %s15, 1
        %s332 = scalar_select %p331, %s15, 1
        %s333 = smul.addr %s332, 4
        %s334 = smul.addr %s333, 4
        %s335 = scalar_lea.vmem %s7, %s334
      $region48: #{actors_forward.1} parent=23 // pred_fallthru
        _
      // Predicated region
      $region49: #{actors_forward.1} parent=23 // pred_check
        %p336 = pneg %p233
      $region50: #{actors_forward.1} parent=23 // pred_check_branch
        %338 = sbr.rel (%p336) target = $region52
      $region51: #{actors_forward.1} parent=23 // pred_region
        %p339 = scmp.lt.s32.totalorder %s15, 1
        %s340 = scalar_select %p339, %s15, 1
        %s341 = scalar_lea.vmem %s8, %s340
      $region52: #{actors_forward.1} parent=23 // pred_fallthru
        _
    $region24: #{actors_forward.1} parent=5 // pred_fallthru
      _
    %p342 = scmp.le.s32.totalorder 1, %s15
    %p343 = scmp.lt.s32.totalorder %s15, 3
    %p344 = pnand %p342, %p343
    %p345 = pneg %p344
    // Predicated region
    $region53: #{actors_forward.1} parent=5 // pred_check
      _
    $region54: #{actors_forward.1} parent=5 // pred_check_branch
      %347 = sbr.rel (%p344) target = $region56
    $region55: #{actors_forward.1} parent=5 // pred_region
      %s348 = ssub.s32 %s15, 1
      %p349 = scmp.lt.s32.totalorder %s20, 1
      %s350 = scalar_select %p349, %s20, 1
      %s351 = smul.addr %s350, 2
      %s352 = smul.addr %s351, 4
      %s353 = scalar_lea.vmem %s0, %s352
      %p354 = pneg %p41
      %p355 = pneg %p38
      %p356 = scmp.lt.s32.totalorder %s20, 1
      %s357 = scalar_select %p356, %s20, 1
      %s358 = smul.addr %s357, 2
      %s359 = smul.addr %s358, 8
      %s360 = scalar_lea.vmem %s1, %s359
      %p361 = pneg %p67
      %p362 = pneg %p64
      %p363 = scmp.lt.s32.totalorder %s20, 1
      %s364 = scalar_select %p363, %s20, 1
      %s365 = smul.addr %s364, 2
      %s366 = smul.addr %s365, 8
      %s367 = scalar_lea.vmem %s2, %s366
      %p368 = pneg %p93
      %p369 = pneg %p90
      %p370 = pneg %p114
      %p371 = pneg %p111
      %p372 = pneg %p135
      %p373 = pneg %p132
      %p374 = scmp.lt.s32.totalorder %s20, 1
      %s375 = scalar_select %p374, %s20, 1
      %s376 = smul.addr %s375, 4
      %s377 = smul.addr %s376, 4
      %s378 = scalar_lea.vmem %s5, %s377
      %p379 = pneg %p161
      %p380 = pneg %p158
      %p381 = scmp.lt.s32.totalorder %s20, 1
      %s382 = scalar_select %p381, %s20, 1
      %s383 = scalar_lea.vmem %s6, %s382
      %p384 = pneg %p187
      %p385 = pneg %p184
      %p386 = scmp.lt.s32.totalorder %s20, 1
      %s387 = scalar_select %p386, %s20, 1
      %s388 = smul.addr %s387, 4
      %s389 = smul.addr %s388, 4
      %s390 = scalar_lea.vmem %s7, %s389
      %p391 = pneg %p213
      %p392 = pneg %p210
      %p393 = scmp.lt.s32.totalorder %s20, 1
      %s394 = scalar_select %p393, %s20, 1
      %s395 = scalar_lea.vmem %s8, %s394
      %p396 = pneg %p239
      %p397 = pneg %p236
      %p398 = pneg %p265
      %p399 = pneg %p262
      %p400 = scmp.lt.s32.totalorder %s20, 1
      %s401 = scalar_select %p400, %s20, 1
      %s402 = smul.addr %s401, 2
      %s403 = smul.addr %s402, 8
      %s404 = scalar_lea.vmem %s9, %s403
      %p405 = scmp.lt.s32.totalorder %s20, 1
      %s406 = scalar_select %p405, %s20, 1
      %s407 = smul.addr %s406, 2
      %s408 = smul.addr %s407, 4
      %s409 = scalar_lea.vmem %s0, %s408
      %p410 = scmp.lt.s32.totalorder %s20, 1
      %s411 = scalar_select %p410, %s20, 1
      %s412 = smul.addr %s411, 2
      %s413 = smul.addr %s412, 8
      %s414 = scalar_lea.vmem %s1, %s413
      %p415 = scmp.lt.s32.totalorder %s20, 1
      %s416 = scalar_select %p415, %s20, 1
      %s417 = smul.addr %s416, 2
      %s418 = smul.addr %s417, 8
      %s419 = scalar_lea.vmem %s2, %s418
      %p420 = scmp.lt.s32.totalorder %s20, 1
      %s421 = scalar_select %p420, %s20, 1
      %s422 = smul.addr %s421, 4
      %s423 = smul.addr %s422, 4
      %s424 = scalar_lea.vmem %s5, %s423
      %p425 = scmp.lt.s32.totalorder %s20, 1
      %s426 = scalar_select %p425, %s20, 1
      %s427 = scalar_lea.vmem %s6, %s426
      %p428 = scmp.lt.s32.totalorder %s20, 1
      %s429 = scalar_select %p428, %s20, 1
      %s430 = smul.addr %s429, 4
      %s431 = smul.addr %s430, 4
      %s432 = scalar_lea.vmem %s7, %s431
      %p433 = scmp.lt.s32.totalorder %s20, 1
      %s434 = scalar_select %p433, %s20, 1
      %s435 = scalar_lea.vmem %s8, %s434
      %p436 = scmp.lt.s32.totalorder %s20, 1
      %s437 = scalar_select %p436, %s20, 1
      %s438 = smul.addr %s437, 2
      %s439 = smul.addr %s438, 8
      %s440 = scalar_lea.vmem %s9, %s439
      %v442 = vld [vmem:[%s409] sm:$0xf]
      %v443 = vld [vmem:[%s409 + $0x4] sm:$0xf]
      %v444 = vld [vmem:[%s3] sm:$0xf]
      %v445 = vld [vmem:[%s4] sm:$0x1]
      %v447 = vperm.slane %v445, 0
      %v451 = vunpack.c.l.b16 %v442
      %v452 = vunpack.c.l.b16 %v443
      %v453 = vpack.c.b16 %v452, %v451
      %vm454 = vcmask 64512
      %v456 = vsel %vm454, %v453, 0
      %vm458 = vcmask 1043456
      %v460 = vsel %vm458, %v444, 0
      %462 = vmatpush.bf16.msra.mxu0 0
      %463 = vmatpush.bf16.msra.mxu0 0
      %464 = vmatpush.bf16.msra.mxu0 0
      %465 = vmatpush.bf16.msra.mxu0 0
      %466 = vmatpush.bf16.msra.mxu0 0
      %467 = vmatpush.bf16.msra.mxu0 0
      %468 = vmatpush.bf16.msra.mxu0 0
      %469 = vmatpush.bf16.msra.mxu0 %v460
      %470 = vmatmul.bf16.gmra.mxu0 %v456
      %v471 = vpop.f32.mrf.mxu0
      %v472 = vadd.f32 %v447, %v471
      %v473 = vpop.f32.mrf.mxu0
      %v474 = vadd.f32 %v447, %v473
      %475 = vdwg.mxu0
      %v476 = vpack.c.bf16 %v474, %v472
      %v477 = vld [vmem:[%s424] sm:$0xf]
      %v478 = vld [vmem:[%s424 + $0x4] sm:$0xf]
      %v479 = vld [vmem:[%s424 + $0x8] sm:$0xf]
      %v480 = vld [vmem:[%s424 + $0xc] sm:$0xf]
      %v481 = vld [vmem:[%s427] sm:$0x1]
      %v483 = vperm.slane %v481, 0
      %v489 = vunpack.c.l.b16 %v477
      %v490 = vunpack.c.l.b16 %v478
      %v491 = vunpack.c.l.b16 %v479
      %v492 = vunpack.c.l.b16 %v480
      %v493 = vpack.c.b16 %v490, %v489
      %v494 = vpack.c.b16 %v492, %v491
      %vm497 = vcmask 261120
      %v499 = vsel %vm497, %v476, 0
      %501 = vmatpush.bf16.msra.mxu0 0
      %502 = vmatpush.bf16.msra.mxu0 0
      %503 = vmatpush.bf16.msra.mxu0 0
      %504 = vmatpush.bf16.msra.mxu0 0
      %505 = vmatpush.bf16.msra.mxu0 0
      %506 = vmatpush.bf16.msra.mxu0 0
      %507 = vmatpush.bf16.msra.mxu0 %v494
      %508 = vmatpush.bf16.msra.mxu0 %v493
      %509 = vmatmul.bf16.gmra.mxu0 %v499
      %v510 = vpop.f32.mrf.mxu0
      %v511 = vadd.f32 %v483, %v510
      %v512 = vpop.f32.mrf.mxu0
      %v513 = vadd.f32 %v483, %v512
      %514 = vdwg.mxu0
      %v515 = vmax.f32 %v511, 0.0
      %v516 = vmax.f32 %v513, 0.0
      %v517 = vpack.c.bf16 %v516, %v515
      %v518 = vld [vmem:[%s432] sm:$0xf]
      %v519 = vld [vmem:[%s432 + $0x4] sm:$0xf]
      %v520 = vld [vmem:[%s432 + $0x8] sm:$0xf]
      %v521 = vld [vmem:[%s432 + $0xc] sm:$0xf]
      %v522 = vld [vmem:[%s435] sm:$0x1]
      %v524 = vperm.slane %v522, 0
      %v530 = vunpack.c.l.b16 %v518
      %v531 = vunpack.c.l.b16 %v519
      %v532 = vunpack.c.l.b16 %v520
      %v533 = vunpack.c.l.b16 %v521
      %v534 = vpack.c.b16 %v531, %v530
      %v535 = vpack.c.b16 %v533, %v532
      %v539 = vsel %vm497, %v517, 0
      %541 = vmatpush.bf16.msra.mxu0 0
      %542 = vmatpush.bf16.msra.mxu0 0
      %543 = vmatpush.bf16.msra.mxu0 0
      %544 = vmatpush.bf16.msra.mxu0 0
      %545 = vmatpush.bf16.msra.mxu0 0
      %546 = vmatpush.bf16.msra.mxu0 0
      %547 = vmatpush.bf16.msra.mxu0 %v535
      %548 = vmatpush.bf16.msra.mxu0 %v534
      %549 = vmatmul.bf16.gmra.mxu0 %v539
      %v550 = vpop.f32.mrf.mxu0
      %v551 = vadd.f32 %v524, %v550
      %v552 = vpop.f32.mrf.mxu0
      %v553 = vadd.f32 %v524, %v552
      %554 = vdwg.mxu0
      %v555 = vlaneseq
      %v556 = vand.u32 %v555, 127
      %v557 = vcvt.s32.f32 %v556
      %v558 = vld [vmem:[%s414] sm:$0xff]
      %v559 = vld [vmem:[%s414 + $0x8] sm:$0xff]
      %561 = vset.pattern.permute.xlu0 0
      %562 = vperm.xlu0 %561, %v558
      %v563 = vpop.permute.xlu0 %562
      %566 = vset.pattern.permute.xlu0 0
      %567 = vperm.xlu0 %566, %v559
      %v568 = vpop.permute.xlu0 %567
      %vm570 = vcmp.lt.f32.partialorder %v557, %v563
      %vm571 = vcmp.lt.f32.partialorder %v557, %v568
      %v572 = vsel %vm570, %v551, -inf
      %v573 = vsel %vm571, %v553, -inf
      %v574 = vld [vmem:[%s419] sm:$0xff]
      %v575 = vld [vmem:[%s419 + $0x8] sm:$0xff]
      %vm576 = vcmp.gt.f32.partialorder %v574, 0.5
      %vm577 = vcmp.gt.f32.partialorder %v575, 0.5
      %v578 = vsel %vm576, 1, 0
      %v579 = vsel %vm577, 1, 0
      %580 = vset.pattern.permute.xlu0 0
      %581 = vperm.xlu0 %580, %v578
      %v582 = vpop.permute.xlu0 %581
      %583 = vset.pattern.permute.xlu0 0
      %584 = vperm.xlu0 %583, %v579
      %v585 = vpop.permute.xlu0 %584
      %vm586 = vcmp.eq.s32.totalorder %v582, 1
      %vm587 = vcmp.eq.s32.totalorder %v585, 1
      %v588 = vsel %vm586, 0.0, %v572
      %v589 = vsel %vm587, 0.0, %v573
      %vm590 = vcmask 130048
      %591 = vst.msk [vmem:[%s440] sm:$0xff] %vm590, %v588
      %592 = vst.msk [vmem:[%s440 + $0x8] sm:$0xff] %vm590, %v589
      %p593 = scmp.lt.s32.totalorder %s20, 1
      %s594 = scalar_select %p593, %s20, 1
      %s595 = smul.addr %s594, 2
      %s596 = smul.addr %s595, 8
      %s597 = scalar_lea.vmem %s9, %s596
      // Predicated region
      $region57: #{actors_forward.1} parent=55 // pred_check
        %p598 = pneg %p262
      $region58: #{actors_forward.1} parent=55 // pred_check_branch
        %600 = sbr.rel (%p598) target = $region60
      $region59: #{actors_forward.1} parent=55 // pred_region
        _
      $region60: #{actors_forward.1} parent=55 // pred_fallthru
        _
    $region56: #{actors_forward.1} parent=5 // pred_fallthru
      _
    %p601 = scmp.le.s32.totalorder 2, %s15
    // Predicated region
    $region61: #{actors_forward.1} parent=5 // pred_check
      %p602 = pneg %p601
    $region62: #{actors_forward.1} parent=5 // pred_check_branch
      %604 = sbr.rel (%p602) target = $region64
    $region63: #{actors_forward.1} parent=5 // pred_region
      %s605 = ssub.s32 %s15, 2
      // Predicated region
      $region65: #{actors_forward.1} parent=63 // pred_check
        %p606 = pneg %p268
      $region66: #{actors_forward.1} parent=63 // pred_check_branch
        %608 = sbr.rel (%p606) target = $region68
      $region67: #{actors_forward.1} parent=63 // pred_region
        %p609 = scmp.lt.s32.totalorder %s21, 1
        %s610 = scalar_select %p609, %s21, 1
        %s611 = smul.addr %s610, 2
        %s612 = smul.addr %s611, 8
        %s613 = scalar_lea.vmem %s9, %s612
      $region68: #{actors_forward.1} parent=63 // pred_fallthru
        _
    $region64: #{actors_forward.1} parent=5 // pred_fallthru
      _
  $region6: #{actors_forward.1} parent=0 // loop_footer
    %s19 = sadd.s32 1, %s15
  $region7: #{actors_forward.1} parent=0 // loop_footer_branch
    %14 = sbr.rel target = $region3
  $region8: #{actors_forward.1} parent=0 // loop_exit
    _

</llo_original>
